<compile_context>
chip_gen: v7x
topology: tpu7x:2x2x1
jax: 0.10.0
libtpu: 0.0.40
codegen_flags: <defaults>
</compile_context>

<pallas_src>
import functools

import jax
import jax.numpy as jnp
from jax.experimental import pallas as pl
from jax.experimental.pallas import tpu as pltpu

BN_EPS = 1e-5


def _round_up(x, m):
    return ((x + m - 1) // m) * m


def _siamese_kernel(hidden_dim, compute_dtype,
                    x1_ref, x2_ref,
                    w1_ref, b1_ref, w2_ref, b2_ref,
                    wc1_ref, bc1_ref, wc2_ref, bc2_ref,
                    o_ref):
    H = hidden_dim
    TB = x1_ref.shape[0]

    # ---- fused twin encoder: stack x1/x2 along the batch (sublane) axis ----
    xs = jnp.concatenate([x1_ref[...], x2_ref[...]], axis=0)       # (2TB, D)
    xs = xs.astype(compute_dtype)

    # Linear(D -> H) with BatchNorm folded into w1/b1 (done in the wrapper).
    h = jnp.dot(xs, w1_ref[...], preferred_element_type=jnp.float32) + b1_ref[...]
    h = jnp.maximum(h, 0.0)                                        # ReLU (f32)
    # Dropout(0.3) -> identity in eval mode.
    # Linear(H -> H)
    h = jnp.dot(h.astype(compute_dtype), w2_ref[...],
                preferred_element_type=jnp.float32) + b2_ref[...]
    h = jnp.maximum(h, 0.0)                                        # ReLU (f32)

    e1 = h[:TB, :]                                                 # (TB, H) f32
    e2 = h[TB:, :]
    diff = jnp.abs(e1 - e2)
    mult = e1 * e2

    # ---- comparator Linear(4H -> 64) ----
    if H % 128 == 0:
        # 128-aligned lane concat -> one deep (K = 4H) MXU contraction.
        feat = jnp.concatenate([e1, e2, diff, mult], axis=1).astype(compute_dtype)
        z = jnp.dot(feat, wc1_ref[...], preferred_element_type=jnp.float32)
    else:
        # Exact decomposition of concat(...) @ Wc1 as 4 partial matmuls.
        wc1 = wc1_ref[...]
        z = (jnp.dot(e1.astype(compute_dtype), wc1[0 * H:1 * H, :],
                     preferred_element_type=jnp.float32)
             + jnp.dot(e2.astype(compute_dtype), wc1[1 * H:2 * H, :],
                       preferred_element_type=jnp.float32)
             + jnp.dot(diff.astype(compute_dtype), wc1[2 * H:3 * H, :],
                       preferred_element_type=jnp.float32)
             + jnp.dot(mult.astype(compute_dtype), wc1[3 * H:4 * H, :],
                       preferred_element_type=jnp.float32))
    z = jnp.maximum(z + bc1_ref[...], 0.0)                         # ReLU (f32)
    # Dropout(0.3) -> identity in eval mode.

    # ---- Linear(64 -> 1) as a VPU multiply-reduce (avoid 1-lane MXU matmul) ----
    logit = jnp.sum(z * wc2_ref[...], axis=-1, keepdims=True) + bc2_ref[...]
    o_ref[...] = jax.nn.sigmoid(logit).astype(o_ref.dtype)


def _prepare_params(params, compute_dtype):
    """One-time constant fold: BN(eval) into w1/b1; cast matmul weights;
    pre-transpose the final (64,1) weight into a (1,64) reduction row."""
    scale = params["bn_gamma"] * jax.lax.rsqrt(params["bn_var"] + BN_EPS)   # (1, H)
    w1f = (params["w1"] * scale).astype(compute_dtype)                      # (D, H)
    b1f = ((params["b1"] - params["bn_mean"]) * scale + params["bn_beta"]
           ).astype(jnp.float32)                                            # (1, H)
    return dict(
        w1=w1f,
        b1=b1f,
        w2=params["w2"].astype(compute_dtype),      # (H, H)
        b2=params["b2"].astype(jnp.float32),        # (1, H)
        wc1=params["wc1"].astype(compute_dtype),    # (4H, 64)
        bc1=params["bc1"].astype(jnp.float32),      # (1, 64)
        wc2_row=params["wc2"].reshape(1, -1).astype(jnp.float32),  # (1, 64)
        bc2=params["bc2"].astype(jnp.float32),      # (1, 1)
    )


def siamese_mlp_v2_forward(x1, x2, params, *, block_batch=256,
                           compute_dtype=jnp.bfloat16):
    """Returns sigmoid logits of shape (B, 1), float32."""
    B, D = x1.shape
    H = params["w2"].shape[0]
    prep = _prepare_params(params, compute_dtype)

    # Batch tile: multiple of 8 sublanes, capped at block_batch (re-derived
    # for v7x's 64 MiB VMEM: resident weights + 2x double-buffered activation
    # tiles stay well under the scoped limit).
    TB = min(block_batch, _round_up(B, 8))
    TB = _round_up(TB, 8)
    Bp = _round_up(B, TB)
    if Bp != B:
        pad = ((0, Bp - B), (0, 0))
        x1 = jnp.pad(x1, pad)
        x2 = jnp.pad(x2, pad)
    grid = (Bp // TB,)

    kernel = functools.partial(_siamese_kernel, H, compute_dtype)

    def tile_spec(d):
        return pl.BlockSpec((TB, d), lambda i: (i, 0))

    def resident_spec(arr):
        # Full-array block, constant index -> stays VMEM-resident across the grid.
        return pl.BlockSpec(arr.shape, lambda i: (0, 0))

    out = pl.pallas_call(
        kernel,
        out_shape=jax.ShapeDtypeStruct((Bp, 1), jnp.float32),
        grid=grid,
        in_specs=[
            tile_spec(D),                   # x1
            tile_spec(D),                   # x2
            resident_spec(prep["w1"]),
            resident_spec(prep["b1"]),
            resident_spec(prep["w2"]),
            resident_spec(prep["b2"]),
            resident_spec(prep["wc1"]),
            resident_spec(prep["bc1"]),
            resident_spec(prep["wc2_row"]),
            resident_spec(prep["bc2"]),
        ],
        out_specs=pl.BlockSpec((TB, 1), lambda i: (i, 0)),
        compiler_params=pltpu.CompilerParams(
            dimension_semantics=("parallel",),       # megacore-shardable on v7x
            vmem_limit_bytes=32 * 1024 * 1024,
        ),
    )(x1, x2, prep["w1"], prep["b1"], prep["w2"], prep["b2"],
      prep["wc1"], prep["bc1"], prep["wc2_row"], prep["bc2"])

    return out[:B]


def init_params(key, input_dim, hidden_dim=128):
    """PyTorch-style init (uniform +/- 1/sqrt(fan_in)); Linear weights stored
    transposed as (in_features, out_features); BN uses fresh eval stats."""
    def linear(key, fan_in, fan_out):
        kw, kb = jax.random.split(key)
        bound = 1.0 / jnp.sqrt(fan_in)
        w = jax.random.uniform(kw, (fan_in, fan_out), jnp.float32, -bound, bound)
        b = jax.random.uniform(kb, (1, fan_out), jnp.float32, -bound, bound)
        return w, b

    k1, k2, k3, k4 = jax.random.split(key, 4)
    w1, b1 = linear(k1, input_dim, hidden_dim)          # encoder Linear 1
    w2, b2 = linear(k2, hidden_dim, hidden_dim)         # encoder Linear 2
    wc1, bc1 = linear(k3, hidden_dim * 4, 64)           # comparator Linear 1
    wc2, bc2 = linear(k4, 64, 1)                        # comparator Linear 2

    return dict(
        w1=w1, b1=b1,
        bn_gamma=jnp.ones((1, hidden_dim), jnp.float32),
        bn_beta=jnp.zeros((1, hidden_dim), jnp.float32),
        bn_mean=jnp.zeros((1, hidden_dim), jnp.float32),
        bn_var=jnp.ones((1, hidden_dim), jnp.float32),
        w2=w2, b2=b2,
        wc1=wc1, bc1=bc1, wc2=wc2, bc2=bc2,
    )


def reference_forward_fp32(x1, x2, p):
    """Pure-f32 reference mirroring the PyTorch module in eval mode."""
    def enc(x):
        h = x @ p["w1"] + p["b1"]
        h = (h - p["bn_mean"]) / jnp.sqrt(p["bn_var"] + BN_EPS) * p["bn_gamma"] + p["bn_beta"]
        h = jnp.maximum(h, 0.0)
        h = h @ p["w2"] + p["b2"]
        return jnp.maximum(h, 0.0)

    e1, e2 = enc(x1), enc(x2)
    feat = jnp.concatenate([e1, e2, jnp.abs(e1 - e2), e1 * e2], axis=1)
    z = jnp.maximum(feat @ p["wc1"] + p["bc1"], 0.0)
    return jax.nn.sigmoid(z @ p["wc2"] + p["bc2"])


def reference_forward_prepared(x1, x2, prep, compute_dtype):
    """Pure-JAX reference mirroring the kernel's exact precision choices."""
    def dot(a, w):
        return jnp.dot(a.astype(compute_dtype), w, preferred_element_type=jnp.float32)

    def enc(x):
        h = jnp.maximum(dot(x, prep["w1"]) + prep["b1"], 0.0)
        return jnp.maximum(dot(h, prep["w2"]) + prep["b2"], 0.0)

    e1, e2 = enc(x1), enc(x2)
    feat = jnp.concatenate([e1, e2, jnp.abs(e1 - e2), e1 * e2], axis=1)
    z = jnp.maximum(dot(feat, prep["wc1"]) + prep["bc1"], 0.0)
    logit = jnp.sum(z * prep["wc2_row"], axis=-1, keepdims=True) + prep["bc2"]
    return jax.nn.sigmoid(logit)


if __name__ == "__main__":
    key = jax.random.PRNGKey(0)
    k_x1, k_x2, k_params = jax.random.split(key, 3)

    batch = 8
    input_dim = 16
    hidden_dim = 128        # module default; exercises the fused 4H concat path

    x1 = jax.random.normal(k_x1, (batch, input_dim), jnp.float32)
    x2 = jax.random.normal(k_x2, (batch, input_dim), jnp.float32)
    params = init_params(k_params, input_dim, hidden_dim)

    out = siamese_mlp_v2_forward(x1, x2, params)
    out = jax.block_until_ready(out)
    assert out.shape == (batch, 1), out.shape

    # Tight check against a reference with identical precision choices.
    prep = _prepare_params(params, jnp.bfloat16)
    ref_same = reference_forward_prepared(x1, x2, prep, jnp.bfloat16)
    assert jnp.allclose(out, ref_same, atol=1e-4, rtol=1e-4), (out, ref_same)

    # Semantic check against the full-f32 PyTorch-mirroring reference
    # (loose tolerance covers bf16-operand matmul rounding).
    ref_f32 = reference_forward_fp32(x1, x2, params)
    assert jnp.allclose(out, ref_f32, atol=2e-2, rtol=2e-2), (out, ref_f32)

    print("KERNEL_OK")
</pallas_src>

<mosaic_0001>
module attributes {stable_mosaic.version = 11 : i64} {
  func.func @_siamese_kernel(%arg0: i32, %arg1: memref<8x16xf32, #tpu.memory_space<vmem>>, %arg2: memref<8x16xf32, #tpu.memory_space<vmem>>, %arg3: memref<16x128xbf16, #tpu.memory_space<vmem>>, %arg4: memref<1x128xf32, #tpu.memory_space<vmem>>, %arg5: memref<128x128xbf16, #tpu.memory_space<vmem>>, %arg6: memref<1x128xf32, #tpu.memory_space<vmem>>, %arg7: memref<512x64xbf16, #tpu.memory_space<vmem>>, %arg8: memref<1x64xf32, #tpu.memory_space<vmem>>, %arg9: memref<1x64xf32, #tpu.memory_space<vmem>>, %arg10: memref<1x1xf32, #tpu.memory_space<vmem>>, %arg11: memref<8x1xf32, #tpu.memory_space<vmem>>) attributes {dimension_semantics = [#tpu.dimension_semantics<parallel>], iteration_bounds = array<i64: 1>, scalar_prefetch = 0 : i64, scratch_operands = 0 : i64, tpu.core_type = #tpu.core_type<tc>, window_params = [{transform_indices = @transform_0, window_bounds = array<i64: 8, 16>}, {transform_indices = @transform_1, window_bounds = array<i64: 8, 16>}, {pipeline_mode = #tpu.pipeline_mode<synchronous>, transform_indices = @transform_2, window_bounds = array<i64: 16, 128>}, {pipeline_mode = #tpu.pipeline_mode<synchronous>, transform_indices = @transform_3, window_bounds = array<i64: 1, 128>}, {pipeline_mode = #tpu.pipeline_mode<synchronous>, transform_indices = @transform_4, window_bounds = array<i64: 128, 128>}, {pipeline_mode = #tpu.pipeline_mode<synchronous>, transform_indices = @transform_5, window_bounds = array<i64: 1, 128>}, {pipeline_mode = #tpu.pipeline_mode<synchronous>, transform_indices = @transform_6, window_bounds = array<i64: 512, 64>}, {pipeline_mode = #tpu.pipeline_mode<synchronous>, transform_indices = @transform_7, window_bounds = array<i64: 1, 64>}, {pipeline_mode = #tpu.pipeline_mode<synchronous>, transform_indices = @transform_8, window_bounds = array<i64: 1, 64>}, {pipeline_mode = #tpu.pipeline_mode<synchronous>, transform_indices = @transform_9, window_bounds = array<i64: 1, 1>}, {transform_indices = @transform_10, window_bounds = array<i64: 8, 1>}]} {
    %c0 = arith.constant 0 : index
    %c0_0 = arith.constant 0 : index
    %0 = vector.load %arg1[%c0, %c0_0] : memref<8x16xf32, #tpu.memory_space<vmem>>, vector<8x16xf32>
    %c0_1 = arith.constant 0 : index
    %c0_2 = arith.constant 0 : index
    %1 = vector.load %arg2[%c0_1, %c0_2] : memref<8x16xf32, #tpu.memory_space<vmem>>, vector<8x16xf32>
    %2 = tpu.concatenate %0, %1 in 0 : vector<8x16xf32>, vector<8x16xf32> -> vector<16x16xf32>
    %3 = arith.truncf %2 : vector<16x16xf32> to vector<16x16xbf16>
    %c0_3 = arith.constant 0 : index
    %c0_4 = arith.constant 0 : index
    %4 = vector.load %arg3[%c0_3, %c0_4] : memref<16x128xbf16, #tpu.memory_space<vmem>>, vector<16x128xbf16>
    %cst = arith.constant dense<0.000000e+00> : vector<16x128xf32>
    %5 = tpu.matmul %3, %4, %cst {dimension_numbers = #tpu.dot_dimension_numbers<[1], [0], [0], [1], [0, 0, 1, 1], [], []>} : vector<16x16xbf16>, vector<16x128xbf16>, vector<16x128xf32> -> vector<16x128xf32>
    %c0_5 = arith.constant 0 : index
    %c0_6 = arith.constant 0 : index
    %6 = vector.load %arg4[%c0_5, %c0_6] : memref<1x128xf32, #tpu.memory_space<vmem>>, vector<1x128xf32>
    %7 = vector.broadcast %6 : vector<1x128xf32> to vector<16x128xf32>
    %8 = arith.addf %5, %7 : vector<16x128xf32>
    %cst_7 = arith.constant 0.000000e+00 : f32
    %9 = vector.broadcast %cst_7 : f32 to vector<16x128xf32>
    %10 = arith.maximumf %8, %9 : vector<16x128xf32>
    %11 = arith.truncf %10 : vector<16x128xf32> to vector<16x128xbf16>
    %c0_8 = arith.constant 0 : index
    %c0_9 = arith.constant 0 : index
    %12 = vector.load %arg5[%c0_8, %c0_9] : memref<128x128xbf16, #tpu.memory_space<vmem>>, vector<128x128xbf16>
    %cst_10 = arith.constant dense<0.000000e+00> : vector<16x128xf32>
    %13 = tpu.matmul %11, %12, %cst_10 {dimension_numbers = #tpu.dot_dimension_numbers<[1], [0], [0], [1], [0, 0, 1, 1], [], []>} : vector<16x128xbf16>, vector<128x128xbf16>, vector<16x128xf32> -> vector<16x128xf32>
    %c0_11 = arith.constant 0 : index
    %c0_12 = arith.constant 0 : index
    %14 = vector.load %arg6[%c0_11, %c0_12] : memref<1x128xf32, #tpu.memory_space<vmem>>, vector<1x128xf32>
    %15 = vector.broadcast %14 : vector<1x128xf32> to vector<16x128xf32>
    %16 = arith.addf %13, %15 : vector<16x128xf32>
    %cst_13 = arith.constant 0.000000e+00 : f32
    %17 = vector.broadcast %cst_13 : f32 to vector<16x128xf32>
    %18 = arith.maximumf %16, %17 : vector<16x128xf32>
    %19 = vector.extract_strided_slice %18 {offsets = [0, 0], sizes = [8, 128], strides = [1, 1]} : vector<16x128xf32> to vector<8x128xf32>
    %20 = vector.extract_strided_slice %18 {offsets = [8, 0], sizes = [8, 128], strides = [1, 1]} : vector<16x128xf32> to vector<8x128xf32>
    %21 = arith.subf %19, %20 : vector<8x128xf32>
    %22 = math.absf %21 : vector<8x128xf32>
    %23 = arith.mulf %19, %20 : vector<8x128xf32>
    %24 = tpu.concatenate %19, %20, %22, %23 in 1 : vector<8x128xf32>, vector<8x128xf32>, vector<8x128xf32>, vector<8x128xf32> -> vector<8x512xf32>
    %25 = arith.truncf %24 : vector<8x512xf32> to vector<8x512xbf16>
    %c0_14 = arith.constant 0 : index
    %c0_15 = arith.constant 0 : index
    %26 = vector.load %arg7[%c0_14, %c0_15] : memref<512x64xbf16, #tpu.memory_space<vmem>>, vector<512x64xbf16>
    %cst_16 = arith.constant dense<0.000000e+00> : vector<8x64xf32>
    %27 = tpu.matmul %25, %26, %cst_16 {dimension_numbers = #tpu.dot_dimension_numbers<[1], [0], [0], [1], [0, 0, 1, 1], [], []>} : vector<8x512xbf16>, vector<512x64xbf16>, vector<8x64xf32> -> vector<8x64xf32>
    %c0_17 = arith.constant 0 : index
    %c0_18 = arith.constant 0 : index
    %28 = vector.load %arg8[%c0_17, %c0_18] : memref<1x64xf32, #tpu.memory_space<vmem>>, vector<1x64xf32>
    %29 = vector.broadcast %28 : vector<1x64xf32> to vector<8x64xf32>
    %30 = arith.addf %27, %29 : vector<8x64xf32>
    %cst_19 = arith.constant 0.000000e+00 : f32
    %31 = vector.broadcast %cst_19 : f32 to vector<8x64xf32>
    %32 = arith.maximumf %30, %31 : vector<8x64xf32>
    %c0_20 = arith.constant 0 : index
    %c0_21 = arith.constant 0 : index
    %33 = vector.load %arg9[%c0_20, %c0_21] : memref<1x64xf32, #tpu.memory_space<vmem>>, vector<1x64xf32>
    %34 = vector.broadcast %33 : vector<1x64xf32> to vector<8x64xf32>
    %35 = arith.mulf %32, %34 : vector<8x64xf32>
    %cst_22 = arith.constant dense<0.000000e+00> : vector<8xf32>
    %36 = vector.multi_reduction <add>, %35, %cst_22 [1] : vector<8x64xf32> to vector<8xf32>
    %37 = vector.shape_cast %36 : vector<8xf32> to vector<8x1xf32>
    %c0_23 = arith.constant 0 : index
    %c0_24 = arith.constant 0 : index
    %38 = vector.load %arg10[%c0_23, %c0_24] : memref<1x1xf32, #tpu.memory_space<vmem>>, vector<1x1xf32>
    %39 = vector.broadcast %38 : vector<1x1xf32> to vector<8x1xf32>
    %40 = arith.addf %37, %39 : vector<8x1xf32>
    %41 = arith.negf %40 : vector<8x1xf32>
    %42 = math.exp %41 : vector<8x1xf32>
    %cst_25 = arith.constant 1.000000e+00 : f32
    %43 = vector.broadcast %cst_25 : f32 to vector<8x1xf32>
    %44 = arith.addf %43, %42 : vector<8x1xf32>
    %45 = arith.divf %43, %44 : vector<8x1xf32>
    %c0_26 = arith.constant 0 : index
    %c0_27 = arith.constant 0 : index
    %46 = vector.load %arg11[%c0_26, %c0_27] : memref<8x1xf32, #tpu.memory_space<vmem>>, vector<8x1xf32>
    tpu.vector_store %arg11[%c0_26, %c0_27], %45 {strides = array<i32>} : memref<8x1xf32, #tpu.memory_space<vmem>>, vector<8x1xf32>,
    return
  }
  func.func @transform_0(%arg0: i32) -> (i32, i32) {
    %c0_i32 = arith.constant 0 : i32
    %c0_i32_0 = arith.constant 0 : i32
    return %arg0, %c0_i32 : i32, i32
  }
  func.func @transform_1(%arg0: i32) -> (i32, i32) {
    %c0_i32 = arith.constant 0 : i32
    %c0_i32_0 = arith.constant 0 : i32
    return %arg0, %c0_i32 : i32, i32
  }
  func.func @transform_2(%arg0: i32) -> (i32, i32) {
    %c0_i32 = arith.constant 0 : i32
    %c0_i32_0 = arith.constant 0 : i32
    %c0_i32_1 = arith.constant 0 : i32
    return %c0_i32, %c0_i32_0 : i32, i32
  }
  func.func @transform_3(%arg0: i32) -> (i32, i32) {
    %c0_i32 = arith.constant 0 : i32
    %c0_i32_0 = arith.constant 0 : i32
    %c0_i32_1 = arith.constant 0 : i32
    return %c0_i32, %c0_i32_0 : i32, i32
  }
  func.func @transform_4(%arg0: i32) -> (i32, i32) {
    %c0_i32 = arith.constant 0 : i32
    %c0_i32_0 = arith.constant 0 : i32
    %c0_i32_1 = arith.constant 0 : i32
    return %c0_i32, %c0_i32_0 : i32, i32
  }
  func.func @transform_5(%arg0: i32) -> (i32, i32) {
    %c0_i32 = arith.constant 0 : i32
    %c0_i32_0 = arith.constant 0 : i32
    %c0_i32_1 = arith.constant 0 : i32
    return %c0_i32, %c0_i32_0 : i32, i32
  }
  func.func @transform_6(%arg0: i32) -> (i32, i32) {
    %c0_i32 = arith.constant 0 : i32
    %c0_i32_0 = arith.constant 0 : i32
    %c0_i32_1 = arith.constant 0 : i32
    return %c0_i32, %c0_i32_0 : i32, i32
  }
  func.func @transform_7(%arg0: i32) -> (i32, i32) {
    %c0_i32 = arith.constant 0 : i32
    %c0_i32_0 = arith.constant 0 : i32
    %c0_i32_1 = arith.constant 0 : i32
    return %c0_i32, %c0_i32_0 : i32, i32
  }
  func.func @transform_8(%arg0: i32) -> (i32, i32) {
    %c0_i32 = arith.constant 0 : i32
    %c0_i32_0 = arith.constant 0 : i32
    %c0_i32_1 = arith.constant 0 : i32
    return %c0_i32, %c0_i32_0 : i32, i32
  }
  func.func @transform_9(%arg0: i32) -> (i32, i32) {
    %c0_i32 = arith.constant 0 : i32
    %c0_i32_0 = arith.constant 0 : i32
    %c0_i32_1 = arith.constant 0 : i32
    return %c0_i32, %c0_i32_0 : i32, i32
  }
  func.func @transform_10(%arg0: i32) -> (i32, i32) {
    %c0_i32 = arith.constant 0 : i32
    %c0_i32_0 = arith.constant 0 : i32
    return %arg0, %c0_i32 : i32, i32
  }
}

</mosaic_0001>

<llo_original>
// kernel: tpu_custom_call.1
$region0: #{tpu_custom_call.1}
  #allocation0 [shape = 'u32[]', space=smem, size = 0x4, offset = 0x4, fixed_abs, tag = 'smem constant byte address 0x4 - core index']
  #allocation1 [shape = 'u32[144,128]{1,0:T(1,128)}', space=vmem, size = 0x12000, scoped, tag = 'internal scratch']
  #allocation2 [shape = 'f32[1,1]{1,0:T(1,128)S(1)}', space=vmem, size = 0x200, scoped, tag = 'scoped memory for tpu_custom_call.1']
  %s0 = inlined_call_operand.vmem [shape: f32[8,16], index: 0, kind: input, shape index: {}]
  %s1 = inlined_call_operand.vmem [shape: f32[8,16], index: 1, kind: input, shape index: {}]
  %s2 = inlined_call_operand.vmem [shape: bf16[16,128], index: 2, kind: input, shape index: {}]
  %s3 = inlined_call_operand.vmem [shape: f32[1,128], index: 3, kind: input, shape index: {}]
  %s4 = inlined_call_operand.vmem [shape: bf16[128,128], index: 4, kind: input, shape index: {}]
  %s5 = inlined_call_operand.vmem [shape: f32[1,128], index: 5, kind: input, shape index: {}]
  %s6 = inlined_call_operand.vmem [shape: bf16[512,64], index: 6, kind: input, shape index: {}]
  %s7 = inlined_call_operand.vmem [shape: f32[1,64], index: 7, kind: input, shape index: {}]
  %s8 = inlined_call_operand.vmem [shape: f32[1,64], index: 8, kind: input, shape index: {}]
  %s9 = inlined_call_operand.<no memory space> [shape: f32[1,1], index: 9, kind: input, shape index: {}]
  %s10 = inlined_call_operand.vmem [shape: f32[8,1], index: 10, kind: output, shape index: {}]
  %s11 = sld [smem:[#allocation0]]
  $region50: #{tpu_custom_call.1} parent=0
    _
  %s13 = ssub.s32 1, %s11
  %s14 = scalar_select 0, %s13, %s11
  %v15 = vstv %s9
  %16 = vst [vmem:[#allocation2] sm:$0x1] %v15
  // Predicated region
  $region2: #{tpu_custom_call.1} parent=0 // pred_check
    _
  $region3: #{tpu_custom_call.1} parent=0 // pred_check_branch
    %18 = sbr.rel (0) target = $region5
  $region4: #{tpu_custom_call.1} parent=0 // pred_region
    _
  $region5: #{tpu_custom_call.1} parent=0 // pred_fallthru
    _
  // Predicated region
  $region6: #{tpu_custom_call.1} parent=0 // pred_check
    _
  $region7: #{tpu_custom_call.1} parent=0 // pred_check_branch
    %20 = sbr.rel (0) target = $region9
  $region8: #{tpu_custom_call.1} parent=0 // pred_region
    _
  $region9: #{tpu_custom_call.1} parent=0 // pred_fallthru
    _
  // Predicated region
  $region10: #{tpu_custom_call.1} parent=0 // pred_check
    _
  $region11: #{tpu_custom_call.1} parent=0 // pred_check_branch
    %22 = sbr.rel (0) target = $region13
  $region12: #{tpu_custom_call.1} parent=0 // pred_region
    _
  $region13: #{tpu_custom_call.1} parent=0 // pred_fallthru
    _
  // Predicated region
  $region14: #{tpu_custom_call.1} parent=0 // pred_check
    _
  $region15: #{tpu_custom_call.1} parent=0 // pred_check_branch
    %24 = sbr.rel (0) target = $region17
  $region16: #{tpu_custom_call.1} parent=0 // pred_region
    _
  $region17: #{tpu_custom_call.1} parent=0 // pred_fallthru
    _
  // Predicated region
  $region18: #{tpu_custom_call.1} parent=0 // pred_check
    _
  $region19: #{tpu_custom_call.1} parent=0 // pred_check_branch
    %26 = sbr.rel (0) target = $region21
  $region20: #{tpu_custom_call.1} parent=0 // pred_region
    _
  $region21: #{tpu_custom_call.1} parent=0 // pred_fallthru
    _
  // Predicated region
  $region22: #{tpu_custom_call.1} parent=0 // pred_check
    _
  $region23: #{tpu_custom_call.1} parent=0 // pred_check_branch
    %28 = sbr.rel (0) target = $region25
  $region24: #{tpu_custom_call.1} parent=0 // pred_region
    _
  $region25: #{tpu_custom_call.1} parent=0 // pred_fallthru
    _
  // Predicated region
  $region26: #{tpu_custom_call.1} parent=0 // pred_check
    _
  $region27: #{tpu_custom_call.1} parent=0 // pred_check_branch
    %30 = sbr.rel (0) target = $region29
  $region28: #{tpu_custom_call.1} parent=0 // pred_region
    _
  $region29: #{tpu_custom_call.1} parent=0 // pred_fallthru
    _
  // Predicated region
  $region30: #{tpu_custom_call.1} parent=0 // pred_check
    _
  $region31: #{tpu_custom_call.1} parent=0 // pred_check_branch
    %32 = sbr.rel (0) target = $region33
  $region32: #{tpu_custom_call.1} parent=0 // pred_region
    _
  $region33: #{tpu_custom_call.1} parent=0 // pred_fallthru
    _
  // Predicated region
  $region34: #{tpu_custom_call.1} parent=0 // pred_check
    _
  $region35: #{tpu_custom_call.1} parent=0 // pred_check_branch
    %34 = sbr.rel (0) target = $region37
  $region36: #{tpu_custom_call.1} parent=0 // pred_region
    _
  $region37: #{tpu_custom_call.1} parent=0 // pred_fallthru
    _
  // Predicated region
  $region38: #{tpu_custom_call.1} parent=0 // pred_check
    _
  $region39: #{tpu_custom_call.1} parent=0 // pred_check_branch
    %36 = sbr.rel (0) target = $region41
  $region40: #{tpu_custom_call.1} parent=0 // pred_region
    _
  $region41: #{tpu_custom_call.1} parent=0 // pred_fallthru
    _
  %v38 = vld [vmem:[%s0] sm:$0xff]
  %v39 = vld [vmem:[%s1] sm:$0xff]
  %v40 = vpack.c.bf16 %v39, %v38
  %v41 = vld [vmem:[%s2] sm:$0xf]
  %v42 = vld [vmem:[%s2 + $0x4] sm:$0xf]
  %v43 = vld [vmem:[%s3] sm:$0x1]
  %v45 = vlaneseq
  %v46 = vshrl.u32 %v45, 7
  %v47 = vsub.s32 0, %v46
  %v48 = vrot.slane %v43, %v47
  %v52 = vunpack.c.l.b16 %v41
  %v53 = vunpack.c.l.b16 %v42
  %v54 = vpack.c.b16 %v53, %v52
  %vm56 = vcmask 130048
  %v58 = vsel %vm56, %v40, 0
  %60 = vmatprep.subr.bf16.mxu0 0
  %61 = vmatpush1.bf16.msra.mxu0 %v54
  %62 = vmatprep.subr.bf16.mxu0 0
  %63 = vmatpush1.bf16.msra.mxu0 0
  %64 = vmatprep.subr.bf16.mxu0 0
  %65 = vmatpush1.bf16.msra.mxu0 0
  %66 = vmatprep.subr.bf16.mxu0 0
  %67 = vmatpush1.bf16.msra.mxu0 0
  %68 = vmatprep.subr.bf16.mxu0 0
  %69 = vmatpush1.bf16.msra.mxu0 0
  %70 = vmatprep.subr.bf16.mxu0 0
  %71 = vmatpush1.bf16.msra.mxu0 0
  %72 = vmatprep.subr.bf16.mxu0 0
  %73 = vmatpush1.bf16.msra.mxu0 0
  %74 = vmatprep.subr.bf16.mxu0 0
  %75 = vmatpush1.bf16.msra.mxu0 0
  %76 = vmatprep.subr.bf16.mxu0 0
  %77 = vmatpush1.bf16.msra.mxu0 0
  %78 = vmatprep.subr.bf16.mxu0 0
  %79 = vmatpush1.bf16.msra.mxu0 0
  %80 = vmatprep.subr.bf16.mxu0 0
  %81 = vmatpush1.bf16.msra.mxu0 0
  %82 = vmatprep.subr.bf16.mxu0 0
  %83 = vmatpush1.bf16.msra.mxu0 0
  %84 = vmatprep.subr.bf16.mxu0 0
  %85 = vmatpush1.bf16.msra.mxu0 0
  %86 = vmatprep.subr.bf16.mxu0 0
  %87 = vmatpush1.bf16.msra.mxu0 0
  %88 = vmatprep.subr.bf16.mxu0 0
  %89 = vmatpush1.bf16.msra.mxu0 0
  %90 = vmatprep.subr.bf16.mxu0 0
  %91 = vmatpush1.bf16.msra.mxu0 0
  %92 = vmatprep.mubr.bf16.mxu0 0
  %93 = vmatmul.mubr.bf16.gmra.mrb[0].mxu0 %v58
  %v94 = vpop.f32.mrb[0].mxu0
  %v95 = vadd.f32 %v48, %v94
  %v96 = vpop.f32.mrb[0].mxu0
  %v97 = vpop.f32.mrb[0].mxu0
  %v98 = vadd.f32 %v48, %v97
  %v99 = vpop.f32.mrb[0].mxu0
  %100 = vdwg.mxu0
  %v101 = vmax.f32 %v95, 0.0
  %v102 = vmax.f32 %v98, 0.0
  %v103 = vpack.c.bf16 %v102, %v101
  %v104 = vld [vmem:[%s4] sm:$0xf]
  %v105 = vld [vmem:[%s4 + $0x4] sm:$0xf]
  %v106 = vld [vmem:[%s4 + $0x8] sm:$0xf]
  %v107 = vld [vmem:[%s4 + $0xc] sm:$0xf]
  %v108 = vld [vmem:[%s4 + $0x10] sm:$0xf]
  %v109 = vld [vmem:[%s4 + $0x14] sm:$0xf]
  %v110 = vld [vmem:[%s4 + $0x18] sm:$0xf]
  %v111 = vld [vmem:[%s4 + $0x1c] sm:$0xf]
  %v112 = vld [vmem:[%s4 + $0x20] sm:$0xf]
  %v113 = vld [vmem:[%s4 + $0x24] sm:$0xf]
  %v114 = vld [vmem:[%s4 + $0x28] sm:$0xf]
  %v115 = vld [vmem:[%s4 + $0x2c] sm:$0xf]
  %v116 = vld [vmem:[%s4 + $0x30] sm:$0xf]
  %v117 = vld [vmem:[%s4 + $0x34] sm:$0xf]
  %v118 = vld [vmem:[%s4 + $0x38] sm:$0xf]
  %v119 = vld [vmem:[%s4 + $0x3c] sm:$0xf]
  %v120 = vld [vmem:[%s5] sm:$0x1]
  %v122 = vlaneseq
  %v123 = vshrl.u32 %v122, 7
  %v124 = vsub.s32 0, %v123
  %v125 = vrot.slane %v120, %v124
  %v143 = vunpack.c.l.b16 %v104
  %v144 = vunpack.c.l.b16 %v105
  %v145 = vunpack.c.l.b16 %v106
  %v146 = vunpack.c.l.b16 %v107
  %v147 = vunpack.c.l.b16 %v108
  %v148 = vunpack.c.l.b16 %v109
  %v149 = vunpack.c.l.b16 %v110
  %v150 = vunpack.c.l.b16 %v111
  %v151 = vunpack.c.l.b16 %v112
  %v152 = vunpack.c.l.b16 %v113
  %v153 = vunpack.c.l.b16 %v114
  %v154 = vunpack.c.l.b16 %v115
  %v155 = vunpack.c.l.b16 %v116
  %v156 = vunpack.c.l.b16 %v117
  %v157 = vunpack.c.l.b16 %v118
  %v158 = vunpack.c.l.b16 %v119
  %v159 = vpack.c.b16 %v144, %v143
  %v160 = vpack.c.b16 %v146, %v145
  %v161 = vpack.c.b16 %v148, %v147
  %v162 = vpack.c.b16 %v150, %v149
  %v163 = vpack.c.b16 %v152, %v151
  %v164 = vpack.c.b16 %v154, %v153
  %v165 = vpack.c.b16 %v156, %v155
  %v166 = vpack.c.b16 %v158, %v157
  %175 = vmatprep.subr.bf16.mxu0 0
  %176 = vmatpush1.bf16.msra.mxu0 %v159
  %177 = vmatprep.subr.bf16.mxu0 0
  %178 = vmatpush1.bf16.msra.mxu0 %v160
  %179 = vmatprep.subr.bf16.mxu0 0
  %180 = vmatpush1.bf16.msra.mxu0 %v161
  %181 = vmatprep.subr.bf16.mxu0 0
  %182 = vmatpush1.bf16.msra.mxu0 %v162
  %183 = vmatprep.subr.bf16.mxu0 0
  %184 = vmatpush1.bf16.msra.mxu0 %v163
  %185 = vmatprep.subr.bf16.mxu0 0
  %186 = vmatpush1.bf16.msra.mxu0 %v164
  %187 = vmatprep.subr.bf16.mxu0 0
  %188 = vmatpush1.bf16.msra.mxu0 %v165
  %189 = vmatprep.subr.bf16.mxu0 0
  %190 = vmatpush1.bf16.msra.mxu0 %v166
  %191 = vmatprep.subr.bf16.mxu0 0
  %192 = vmatpush1.bf16.msra.mxu0 0
  %193 = vmatprep.subr.bf16.mxu0 0
  %194 = vmatpush1.bf16.msra.mxu0 0
  %195 = vmatprep.subr.bf16.mxu0 0
  %196 = vmatpush1.bf16.msra.mxu0 0
  %197 = vmatprep.subr.bf16.mxu0 0
  %198 = vmatpush1.bf16.msra.mxu0 0
  %199 = vmatprep.subr.bf16.mxu0 0
  %200 = vmatpush1.bf16.msra.mxu0 0
  %201 = vmatprep.subr.bf16.mxu0 0
  %202 = vmatpush1.bf16.msra.mxu0 0
  %203 = vmatprep.subr.bf16.mxu0 0
  %204 = vmatpush1.bf16.msra.mxu0 0
  %205 = vmatprep.subr.bf16.mxu0 0
  %206 = vmatpush1.bf16.msra.mxu0 0
  %207 = vmatprep.mubr.bf16.mxu0 0
  %208 = vmatmul.mubr.bf16.gmra.mrb[0].mxu0 %v103
  %v209 = vpop.f32.mrb[0].mxu0
  %v210 = vadd.f32 %v125, %v209
  %v211 = vpop.f32.mrb[0].mxu0
  %v212 = vpop.f32.mrb[0].mxu0
  %v213 = vadd.f32 %v125, %v212
  %v214 = vpop.f32.mrb[0].mxu0
  %215 = vdwg.mxu0
  %v216 = vmax.f32 %v210, 0.0
  %v217 = vmax.f32 %v213, 0.0
  %v218 = vsub.f32 %v216, %v217
  %v219 = vand.u32 2147483647, %v218
  %v220 = vmul.f32 %v216, %v217
  %v221 = vpack.c.bf16 %v216, %v216
  %v222 = vpack.c.bf16 %v217, %v217
  %v223 = vpack.c.bf16 %v219, %v219
  %v224 = vpack.c.bf16 %v220, %v220
  %v225 = vld [vmem:[%s6] sm:$0xf]
  %v226 = vld [vmem:[%s6 + $0x4] sm:$0xf]
  %v227 = vld [vmem:[%s6 + $0x8] sm:$0xf]
  %v228 = vld [vmem:[%s6 + $0xc] sm:$0xf]
  %v229 = vld [vmem:[%s6 + $0x10] sm:$0xf]
  %v230 = vld [vmem:[%s6 + $0x14] sm:$0xf]
  %v231 = vld [vmem:[%s6 + $0x18] sm:$0xf]
  %v232 = vld [vmem:[%s6 + $0x1c] sm:$0xf]
  %v233 = vld [vmem:[%s6 + $0x20] sm:$0xf]
  %v234 = vld [vmem:[%s6 + $0x24] sm:$0xf]
  %v235 = vld [vmem:[%s6 + $0x28] sm:$0xf]
  %v236 = vld [vmem:[%s6 + $0x2c] sm:$0xf]
  %v237 = vld [vmem:[%s6 + $0x30] sm:$0xf]
  %v238 = vld [vmem:[%s6 + $0x34] sm:$0xf]
  %v239 = vld [vmem:[%s6 + $0x38] sm:$0xf]
  %v240 = vld [vmem:[%s6 + $0x3c] sm:$0xf]
  %v241 = vld [vmem:[%s6 + $0x40] sm:$0xf]
  %v242 = vld [vmem:[%s6 + $0x44] sm:$0xf]
  %v243 = vld [vmem:[%s6 + $0x48] sm:$0xf]
  %v244 = vld [vmem:[%s6 + $0x4c] sm:$0xf]
  %v245 = vld [vmem:[%s6 + $0x50] sm:$0xf]
  %v246 = vld [vmem:[%s6 + $0x54] sm:$0xf]
  %v247 = vld [vmem:[%s6 + $0x58] sm:$0xf]
  %v248 = vld [vmem:[%s6 + $0x5c] sm:$0xf]
  %v249 = vld [vmem:[%s6 + $0x60] sm:$0xf]
  %v250 = vld [vmem:[%s6 + $0x64] sm:$0xf]
  %v251 = vld [vmem:[%s6 + $0x68] sm:$0xf]
  %v252 = vld [vmem:[%s6 + $0x6c] sm:$0xf]
  %v253 = vld [vmem:[%s6 + $0x70] sm:$0xf]
  %v254 = vld [vmem:[%s6 + $0x74] sm:$0xf]
  %v255 = vld [vmem:[%s6 + $0x78] sm:$0xf]
  %v256 = vld [vmem:[%s6 + $0x7c] sm:$0xf]
  %v257 = vld [vmem:[%s6 + $0x80] sm:$0xf]
  %v258 = vld [vmem:[%s6 + $0x84] sm:$0xf]
  %v259 = vld [vmem:[%s6 + $0x88] sm:$0xf]
  %v260 = vld [vmem:[%s6 + $0x8c] sm:$0xf]
  %v261 = vld [vmem:[%s6 + $0x90] sm:$0xf]
  %v262 = vld [vmem:[%s6 + $0x94] sm:$0xf]
  %v263 = vld [vmem:[%s6 + $0x98] sm:$0xf]
  %v264 = vld [vmem:[%s6 + $0x9c] sm:$0xf]
  %v265 = vld [vmem:[%s6 + $0xa0] sm:$0xf]
  %v266 = vld [vmem:[%s6 + $0xa4] sm:$0xf]
  %v267 = vld [vmem:[%s6 + $0xa8] sm:$0xf]
  %v268 = vld [vmem:[%s6 + $0xac] sm:$0xf]
  %v269 = vld [vmem:[%s6 + $0xb0] sm:$0xf]
  %v270 = vld [vmem:[%s6 + $0xb4] sm:$0xf]
  %v271 = vld [vmem:[%s6 + $0xb8] sm:$0xf]
  %v272 = vld [vmem:[%s6 + $0xbc] sm:$0xf]
  %v273 = vld [vmem:[%s6 + $0xc0] sm:$0xf]
  %v274 = vld [vmem:[%s6 + $0xc4] sm:$0xf]
  %v275 = vld [vmem:[%s6 + $0xc8] sm:$0xf]
  %v276 = vld [vmem:[%s6 + $0xcc] sm:$0xf]
  %v277 = vld [vmem:[%s6 + $0xd0] sm:$0xf]
  %v278 = vld [vmem:[%s6 + $0xd4] sm:$0xf]
  %v279 = vld [vmem:[%s6 + $0xd8] sm:$0xf]
  %v280 = vld [vmem:[%s6 + $0xdc] sm:$0xf]
  %v281 = vld [vmem:[%s6 + $0xe0] sm:$0xf]
  %v282 = vld [vmem:[%s6 + $0xe4] sm:$0xf]
  %v283 = vld [vmem:[%s6 + $0xe8] sm:$0xf]
  %v284 = vld [vmem:[%s6 + $0xec] sm:$0xf]
  %v285 = vld [vmem:[%s6 + $0xf0] sm:$0xf]
  %v286 = vld [vmem:[%s6 + $0xf4] sm:$0xf]
  %v287 = vld [vmem:[%s6 + $0xf8] sm:$0xf]
  %v288 = vld [vmem:[%s6 + $0xfc] sm:$0xf]
  %v289 = vld [vmem:[%s7] sm:$0x1]
  %v291 = vlaneseq
  %v292 = vshrl.u32 %v291, 7
  %v293 = vsub.s32 0, %v292
  %v294 = vrot.slane %v289, %v293
  %v360 = vunpack.c.l.b16 %v225
  %v361 = vunpack.c.l.b16 %v226
  %v362 = vunpack.c.l.b16 %v227
  %v363 = vunpack.c.l.b16 %v228
  %v364 = vunpack.c.l.b16 %v229
  %v365 = vunpack.c.l.b16 %v230
  %v366 = vunpack.c.l.b16 %v231
  %v367 = vunpack.c.l.b16 %v232
  %v368 = vunpack.c.l.b16 %v233
  %v369 = vunpack.c.l.b16 %v234
  %v370 = vunpack.c.l.b16 %v235
  %v371 = vunpack.c.l.b16 %v236
  %v372 = vunpack.c.l.b16 %v237
  %v373 = vunpack.c.l.b16 %v238
  %v374 = vunpack.c.l.b16 %v239
  %v375 = vunpack.c.l.b16 %v240
  %v376 = vunpack.c.l.b16 %v241
  %v377 = vunpack.c.l.b16 %v242
  %v378 = vunpack.c.l.b16 %v243
  %v379 = vunpack.c.l.b16 %v244
  %v380 = vunpack.c.l.b16 %v245
  %v381 = vunpack.c.l.b16 %v246
  %v382 = vunpack.c.l.b16 %v247
  %v383 = vunpack.c.l.b16 %v248
  %v384 = vunpack.c.l.b16 %v249
  %v385 = vunpack.c.l.b16 %v250
  %v386 = vunpack.c.l.b16 %v251
  %v387 = vunpack.c.l.b16 %v252
  %v388 = vunpack.c.l.b16 %v253
  %v389 = vunpack.c.l.b16 %v254
  %v390 = vunpack.c.l.b16 %v255
  %v391 = vunpack.c.l.b16 %v256
  %v392 = vunpack.c.l.b16 %v257
  %v393 = vunpack.c.l.b16 %v258
  %v394 = vunpack.c.l.b16 %v259
  %v395 = vunpack.c.l.b16 %v260
  %v396 = vunpack.c.l.b16 %v261
  %v397 = vunpack.c.l.b16 %v262
  %v398 = vunpack.c.l.b16 %v263
  %v399 = vunpack.c.l.b16 %v264
  %v400 = vunpack.c.l.b16 %v265
  %v401 = vunpack.c.l.b16 %v266
  %v402 = vunpack.c.l.b16 %v267
  %v403 = vunpack.c.l.b16 %v268
  %v404 = vunpack.c.l.b16 %v269
  %v405 = vunpack.c.l.b16 %v270
  %v406 = vunpack.c.l.b16 %v271
  %v407 = vunpack.c.l.b16 %v272
  %v408 = vunpack.c.l.b16 %v273
  %v409 = vunpack.c.l.b16 %v274
  %v410 = vunpack.c.l.b16 %v275
  %v411 = vunpack.c.l.b16 %v276
  %v412 = vunpack.c.l.b16 %v277
  %v413 = vunpack.c.l.b16 %v278
  %v414 = vunpack.c.l.b16 %v279
  %v415 = vunpack.c.l.b16 %v280
  %v416 = vunpack.c.l.b16 %v281
  %v417 = vunpack.c.l.b16 %v282
  %v418 = vunpack.c.l.b16 %v283
  %v419 = vunpack.c.l.b16 %v284
  %v420 = vunpack.c.l.b16 %v285
  %v421 = vunpack.c.l.b16 %v286
  %v422 = vunpack.c.l.b16 %v287
  %v423 = vunpack.c.l.b16 %v288
  %v424 = vpack.c.b16 %v361, %v360
  %v425 = vpack.c.b16 %v363, %v362
  %v426 = vpack.c.b16 %v365, %v364
  %v427 = vpack.c.b16 %v367, %v366
  %v428 = vpack.c.b16 %v369, %v368
  %v429 = vpack.c.b16 %v371, %v370
  %v430 = vpack.c.b16 %v373, %v372
  %v431 = vpack.c.b16 %v375, %v374
  %v432 = vpack.c.b16 %v377, %v376
  %v433 = vpack.c.b16 %v379, %v378
  %v434 = vpack.c.b16 %v381, %v380
  %v435 = vpack.c.b16 %v383, %v382
  %v436 = vpack.c.b16 %v385, %v384
  %v437 = vpack.c.b16 %v387, %v386
  %v438 = vpack.c.b16 %v389, %v388
  %v439 = vpack.c.b16 %v391, %v390
  %v440 = vpack.c.b16 %v393, %v392
  %v441 = vpack.c.b16 %v395, %v394
  %v442 = vpack.c.b16 %v397, %v396
  %v443 = vpack.c.b16 %v399, %v398
  %v444 = vpack.c.b16 %v401, %v400
  %v445 = vpack.c.b16 %v403, %v402
  %v446 = vpack.c.b16 %v405, %v404
  %v447 = vpack.c.b16 %v407, %v406
  %v448 = vpack.c.b16 %v409, %v408
  %v449 = vpack.c.b16 %v411, %v410
  %v450 = vpack.c.b16 %v413, %v412
  %v451 = vpack.c.b16 %v415, %v414
  %v452 = vpack.c.b16 %v417, %v416
  %v453 = vpack.c.b16 %v419, %v418
  %v454 = vpack.c.b16 %v421, %v420
  %v455 = vpack.c.b16 %v423, %v422
  %488 = vmatprep.subr.bf16.mxu0 0
  %489 = vmatpush1.bf16.msra.mxu0 %v424
  %490 = vmatprep.subr.bf16.mxu0 0
  %491 = vmatpush1.bf16.msra.mxu0 %v425
  %492 = vmatprep.subr.bf16.mxu0 0
  %493 = vmatpush1.bf16.msra.mxu0 %v426
  %494 = vmatprep.subr.bf16.mxu0 0
  %495 = vmatpush1.bf16.msra.mxu0 %v427
  %496 = vmatprep.subr.bf16.mxu0 0
  %497 = vmatpush1.bf16.msra.mxu0 %v428
  %498 = vmatprep.subr.bf16.mxu0 0
  %499 = vmatpush1.bf16.msra.mxu0 %v429
  %500 = vmatprep.subr.bf16.mxu0 0
  %501 = vmatpush1.bf16.msra.mxu0 %v430
  %502 = vmatprep.subr.bf16.mxu0 0
  %503 = vmatpush1.bf16.msra.mxu0 %v431
  %504 = vmatprep.subr.bf16.mxu0 0
  %505 = vmatpush1.bf16.msra.mxu0 %v432
  %506 = vmatprep.subr.bf16.mxu0 0
  %507 = vmatpush1.bf16.msra.mxu0 %v433
  %508 = vmatprep.subr.bf16.mxu0 0
  %509 = vmatpush1.bf16.msra.mxu0 %v434
  %510 = vmatprep.subr.bf16.mxu0 0
  %511 = vmatpush1.bf16.msra.mxu0 %v435
  %512 = vmatprep.subr.bf16.mxu0 0
  %513 = vmatpush1.bf16.msra.mxu0 %v436
  %514 = vmatprep.subr.bf16.mxu0 0
  %515 = vmatpush1.bf16.msra.mxu0 %v437
  %516 = vmatprep.subr.bf16.mxu0 0
  %517 = vmatpush1.bf16.msra.mxu0 %v438
  %518 = vmatprep.subr.bf16.mxu0 0
  %519 = vmatpush1.bf16.msra.mxu0 %v439
  %520 = vmatprep.mubr.bf16.mxu0 %v222
  %521 = vmatmul.mubr.bf16.gmra.mrb[0].mxu0 %v221
  %v522 = vpop.f32.mrb[0].mxu0
  %v523 = vadd.f32 %v294, %v522
  %v524 = vpop.f32.mrb[0].mxu0
  %v525 = vpop.f32.mrb[0].mxu0
  %v526 = vpop.f32.mrb[0].mxu0
  %527 = vdwg.mxu0
  %528 = vmatprep.subr.bf16.mxu0 0
  %529 = vmatpush1.bf16.msra.mxu0 %v440
  %530 = vmatprep.subr.bf16.mxu0 0
  %531 = vmatpush1.bf16.msra.mxu0 %v441
  %532 = vmatprep.subr.bf16.mxu0 0
  %533 = vmatpush1.bf16.msra.mxu0 %v442
  %534 = vmatprep.subr.bf16.mxu0 0
  %535 = vmatpush1.bf16.msra.mxu0 %v443
  %536 = vmatprep.subr.bf16.mxu0 0
  %537 = vmatpush1.bf16.msra.mxu0 %v444
  %538 = vmatprep.subr.bf16.mxu0 0
  %539 = vmatpush1.bf16.msra.mxu0 %v445
  %540 = vmatprep.subr.bf16.mxu0 0
  %541 = vmatpush1.bf16.msra.mxu0 %v446
  %542 = vmatprep.subr.bf16.mxu0 0
  %543 = vmatpush1.bf16.msra.mxu0 %v447
  %544 = vmatprep.subr.bf16.mxu0 0
  %545 = vmatpush1.bf16.msra.mxu0 %v448
  %546 = vmatprep.subr.bf16.mxu0 0
  %547 = vmatpush1.bf16.msra.mxu0 %v449
  %548 = vmatprep.subr.bf16.mxu0 0
  %549 = vmatpush1.bf16.msra.mxu0 %v450
  %550 = vmatprep.subr.bf16.mxu0 0
  %551 = vmatpush1.bf16.msra.mxu0 %v451
  %552 = vmatprep.subr.bf16.mxu0 0
  %553 = vmatpush1.bf16.msra.mxu0 %v452
  %554 = vmatprep.subr.bf16.mxu0 0
  %555 = vmatpush1.bf16.msra.mxu0 %v453
  %556 = vmatprep.subr.bf16.mxu0 0
  %557 = vmatpush1.bf16.msra.mxu0 %v454
  %558 = vmatprep.subr.bf16.mxu0 0
  %559 = vmatpush1.bf16.msra.mxu0 %v455
  %560 = vmatprep.mubr.bf16.mxu0 %v224
  %561 = vmatmul.mubr.bf16.gmra.mrb[0].mxu0 %v223
  %v562 = vpop.f32.mrb[0].mxu0
  %v563 = vadd.f32 %v523, %v562
  %v564 = vpop.f32.mrb[0].mxu0
  %v565 = vpop.f32.mrb[0].mxu0
  %v566 = vpop.f32.mrb[0].mxu0
  %567 = vdwg.mxu0
  %v568 = vmax.f32 %v563, 0.0
  %v569 = vld [vmem:[%s8] sm:$0x1]
  %v571 = vlaneseq
  %v572 = vshrl.u32 %v571, 7
  %v573 = vsub.s32 0, %v572
  %v574 = vrot.slane %v569, %v573
  %v576 = vmul.f32 %v568, %v574
  %vm577 = vcmask 523264
  %v578 = vsel %vm577, %v576, 0.0
  %579 = vadd.xlane.f32.xlu0 %v578
  %v580 = vpop.xlane.xlu0 %579
  %v581 = vld [vmem:[#allocation2] sm:$0x1]
  %v583 = vlaneseq
  %v584 = vshrl.u32 %v583, 7
  %v585 = vsub.s32 0, %v584
  %v586 = vrot.slane %v581, %v585
  %v588 = vadd.f32 %v580, %v586
  %v589 = vxor.u32 %v588, 2147483648
  %v590 = vmul.f32 %v589, 1.442695
  %v591 = vpow.pop %v590
  %v592 = vadd.f32 %v591, 1.0
  %v593 = vrcp.pop %v592
  %v594 = vmul.f32 1.0, %v593
  %vm595 = vcmask 7168
  %596 = vst.msk [vmem:[%s10] sm:$0xff] %vm595, %v594
  // Predicated region
  $region42: #{tpu_custom_call.1} parent=0 // pred_check
    _
  $region43: #{tpu_custom_call.1} parent=0 // pred_check_branch
    %598 = sbr.rel (0) target = $region45
  $region44: #{tpu_custom_call.1} parent=0 // pred_region
    _
  $region45: #{tpu_custom_call.1} parent=0 // pred_fallthru
    _
  // Predicated region
  $region46: #{tpu_custom_call.1} parent=0 // pred_check
    _
  $region47: #{tpu_custom_call.1} parent=0 // pred_check_branch
    %600 = sbr.rel (0) target = $region49
  $region48: #{tpu_custom_call.1} parent=0 // pred_region
    _
  $region49: #{tpu_custom_call.1} parent=0 // pred_fallthru
    _

</llo_original>
